<compile_context>
chip_gen: v5e
topology: v5e:2x2
jax: 0.10.0
libtpu: 0.0.40
codegen_flags: <defaults>
</compile_context>

<pallas_src>
import functools
import math

import jax
import jax.numpy as jnp
from jax import lax
from jax.experimental import pallas as pl
from jax.experimental.pallas import tpu as pltpu


def _pe_dropout_kernel(seed_ref, x_ref, pe_ref, o_ref, *,
                       p: float, train: bool, B: int, D: int):
    # x_ref: (ts, tb, D) VMEM, pe_ref: (ts, 1, D) VMEM, seed_ref: (1,) SMEM
    ts, tb, _ = x_ref.shape
    val = x_ref[...] + pe_ref[...]                      # broadcast add over batch

    if not (train and p > 0.0):
        o_ref[...] = val.astype(o_ref.dtype)
        return
    if p >= 1.0:                                        # degenerate: drop everything
        o_ref[...] = jnp.zeros_like(o_ref)
        return

    # Counter-based dropout mask, independent of the tiling.
    # Row counter built at narrow (ts, tb, 1); one full-width add + finalizer.
    # TODO(synk): for v7x train-mode, switch to pltpu.prng_seed/prng_random_bits
    # (per-block seed) - at 3.2 TB/s HBM the jnp hash can become VALU-bound.
    s_i = lax.broadcasted_iota(jnp.int32, (ts, tb, 1), 0) + pl.program_id(0) * ts
    b_i = lax.broadcasted_iota(jnp.int32, (ts, tb, 1), 1) + pl.program_id(1) * tb
    base = ((s_i * B + b_i) * D).astype(jnp.uint32)     # (ts, tb, 1), narrow width
    d_i = lax.broadcasted_iota(jnp.uint32, (ts, tb, D), 2)
    idx = base + d_i                                    # global element counter

    seed_mix = seed_ref[0].astype(jnp.uint32) * jnp.uint32(0x9E3779B9)
    h = idx ^ seed_mix
    h = (h ^ (h >> 16)) * jnp.uint32(0x85EBCA6B)        # murmur3 finalizer
    h = (h ^ (h >> 13)) * jnp.uint32(0xC2B2AE35)
    h = h ^ (h >> 16)

    threshold = jnp.uint32(min(int(round(p * 2.0 ** 32)), 2 ** 32 - 1))
    keep = h >= threshold                               # keep with prob (1 - p)

    # Apply inverted-dropout scale in f32, cast once at the store.
    scaled = val.astype(jnp.float32) * jnp.where(
        keep, jnp.float32(1.0 / (1.0 - p)), jnp.float32(0.0))
    o_ref[...] = scaled.astype(o_ref.dtype)


def make_positional_encoding_buffer(d_model: int, max_len: int = 16) -> jax.Array:
    """Deterministic construction of the `pe` buffer, same math as __init__."""
    position = jnp.arange(max_len, dtype=jnp.float32)[:, None]            # (L, 1)
    div_term = jnp.exp(
        jnp.arange(0, d_model, 2, dtype=jnp.float32) * (-math.log(10000.0) / d_model)
    )                                                                      # (D/2,)
    pe = jnp.zeros((max_len, 1, d_model), dtype=jnp.float32)
    pe = pe.at[:, 0, 0::2].set(jnp.sin(position * div_term))
    pe = pe.at[:, 0, 1::2].set(jnp.cos(position * div_term))
    return pe


def _choose_tiles(S: int, B: int, D: int, itemsize: int,
                  target_bytes: int = 4 * 1024 * 1024) -> tuple[int, int]:
    """Pick (ts, tb) so one (ts, tb, D) block is ~target_bytes, layout-legal,
    and the grid has enough steps for pipelining / both v7x TensorCores."""
    packing = 8 * max(1, 4 // itemsize)       # sublane rows per packed vreg
    row_bytes = B * D * itemsize              # one full seq-position slab
    if row_bytes <= target_bytes:
        tb = B                                # full batch per block (always legal)
        ts = max(1, min(S, target_bytes // row_bytes))
        if S >= 8:                            # keep >= ~8 grid steps for pipelining
            ts = min(ts, pl.cdiv(S, 8))
    else:                                     # single seq row already too big: tile B
        ts = 1
        tb = max(1, target_bytes // (D * itemsize))
        if tb < B:
            tb = min(B, max(packing, (tb // packing) * packing))
        else:
            tb = B
    return ts, tb


def positional_encoding(
    x: jax.Array,
    pe: jax.Array,
    *,
    p: float = 0.1,
    train: bool = False,
    seed: int = 0,
) -> jax.Array:
    """x: (seq, batch, d_model), pe: (max_len, 1, d_model); seq == max_len."""
    S, B, D = x.shape
    assert pe.shape == (S, 1, D), (pe.shape, x.shape)

    pe = pe.astype(x.dtype)                   # avoid implicit promotion in-kernel
    itemsize = jnp.dtype(x.dtype).itemsize
    ts, tb = _choose_tiles(S, B, D, itemsize)
    grid = (pl.cdiv(S, ts), pl.cdiv(B, tb))

    # VMEM budget: double-buffered x-in + out blocks, (tiny) pe block, margin.
    block_bytes = ts * tb * D * itemsize
    pe_block_bytes = ts * D * itemsize
    needed = 4 * block_bytes + 2 * pe_block_bytes + (1 << 20)
    vmem_limit = int(min(max(needed, 8 * 1024 * 1024), 48 * 1024 * 1024))

    kernel = functools.partial(
        _pe_dropout_kernel, p=float(p), train=bool(train), B=B, D=D)
    seed_arr = jnp.asarray([seed], dtype=jnp.int32)

    grid_spec = pltpu.PrefetchScalarGridSpec(
        num_scalar_prefetch=1,                            # seed -> SMEM
        grid=grid,
        in_specs=[
            # x: tiled over seq and batch; full feature dim per block.
            pl.BlockSpec((ts, tb, D), lambda si, bi, seed_ref: (si, bi, 0)),
            # pe: follows the seq tile only; resident across all batch tiles.
            pl.BlockSpec((ts, 1, D), lambda si, bi, seed_ref: (si, 0, 0)),
        ],
        out_specs=pl.BlockSpec((ts, tb, D), lambda si, bi, seed_ref: (si, bi, 0)),
    )

    return pl.pallas_call(
        kernel,
        out_shape=jax.ShapeDtypeStruct(x.shape, x.dtype),
        grid_spec=grid_spec,
        compiler_params=pltpu.CompilerParams(
            dimension_semantics=("parallel", "parallel"),  # shard across TCs
            vmem_limit_bytes=vmem_limit,
        ),
    )(seed_arr, x, pe)


if __name__ == "__main__":
    d_model = 32
    max_len = 16   # module default
    batch = 2

    key = jax.random.PRNGKey(0)
    x = jax.random.normal(key, (max_len, batch, d_model), dtype=jnp.float32)
    pe = make_positional_encoding_buffer(d_model, max_len)

    # Eval-mode forward (dropout = identity): deterministic, check vs reference.
    out_eval = positional_encoding(x, pe, p=0.1, train=False)
    out_eval = jax.block_until_ready(out_eval)
    ref = x + pe   # same broadcast as the torch module
    assert out_eval.shape == (max_len, batch, d_model)
    assert jnp.allclose(out_eval, ref, atol=1e-6, rtol=1e-6)

    # Training-mode forward: exercises in-kernel dropout.
    p_drop = 0.1
    out_train = positional_encoding(x, pe, p=p_drop, train=True, seed=1234)
    out_train = jax.block_until_ready(out_train)
    assert out_train.shape == (max_len, batch, d_model)
    assert bool(jnp.all(jnp.isfinite(out_train)))
    # Every entry is either exactly 0 (dropped) or (x + pe)/(1 - p) (kept).
    scaled_ref = ref / (1.0 - p_drop)
    close_to_scaled = jnp.isclose(out_train, scaled_ref, atol=1e-5, rtol=1e-5)
    is_zero = out_train == 0
    assert bool(jnp.all(close_to_scaled | is_zero))
    drop_frac = float(jnp.mean(is_zero.astype(jnp.float32)))
    assert 0.0 <= drop_frac <= 0.5   # loose sanity check on the mask density

    print("KERNEL_OK")
</pallas_src>

<mosaic_0001>
module attributes {stable_mosaic.version = 11 : i64} {
  func.func @_pe_dropout_kernel(%arg0: i32, %arg1: i32, %arg2: memref<1xi32, #tpu.memory_space<smem>>, %arg3: memref<2x2x32xf32, #tpu.memory_space<vmem>>, %arg4: memref<2x1x32xf32, #tpu.memory_space<vmem>>, %arg5: memref<2x2x32xf32, #tpu.memory_space<vmem>>) attributes {dimension_semantics = [#tpu.dimension_semantics<parallel>, #tpu.dimension_semantics<parallel>], iteration_bounds = array<i64: 8, 1>, scalar_prefetch = 1 : i64, scratch_operands = 0 : i64, tpu.core_type = #tpu.core_type<tc>, window_params = [{transform_indices = @transform_0, window_bounds = array<i64: 2, 2, 32>}, {transform_indices = @transform_1, window_bounds = array<i64: 2, 1, 32>}, {transform_indices = @transform_2, window_bounds = array<i64: 2, 2, 32>}]} {
    %c0 = arith.constant 0 : index
    %c0_0 = arith.constant 0 : index
    %c0_1 = arith.constant 0 : index
    %0 = vector.load %arg3[%c0, %c0_0, %c0_1] : memref<2x2x32xf32, #tpu.memory_space<vmem>>, vector<2x2x32xf32>
    %c0_2 = arith.constant 0 : index
    %c0_3 = arith.constant 0 : index
    %c0_4 = arith.constant 0 : index
    %1 = vector.load %arg4[%c0_2, %c0_3, %c0_4] : memref<2x1x32xf32, #tpu.memory_space<vmem>>, vector<2x1x32xf32>
    %2 = vector.broadcast %1 : vector<2x1x32xf32> to vector<2x2x32xf32>
    %3 = arith.addf %0, %2 : vector<2x2x32xf32>
    %c0_5 = arith.constant 0 : index
    %c0_6 = arith.constant 0 : index
    %c0_7 = arith.constant 0 : index
    %4 = vector.load %arg5[%c0_5, %c0_6, %c0_7] : memref<2x2x32xf32, #tpu.memory_space<vmem>>, vector<2x2x32xf32>
    tpu.vector_store %arg5[%c0_5, %c0_6, %c0_7], %3 {strides = array<i32>} : memref<2x2x32xf32, #tpu.memory_space<vmem>>, vector<2x2x32xf32>,
    return
  }
  func.func @transform_0(%arg0: i32, %arg1: i32, %arg2: memref<1xi32, #tpu.memory_space<smem>>) -> (i32, i32, i32) {
    %c0_i32 = arith.constant 0 : i32
    %c0_i32_0 = arith.constant 0 : i32
    return %arg0, %arg1, %c0_i32 : i32, i32, i32
  }
  func.func @transform_1(%arg0: i32, %arg1: i32, %arg2: memref<1xi32, #tpu.memory_space<smem>>) -> (i32, i32, i32) {
    %c0_i32 = arith.constant 0 : i32
    %c0_i32_0 = arith.constant 0 : i32
    %c0_i32_1 = arith.constant 0 : i32
    return %arg0, %c0_i32, %c0_i32_0 : i32, i32, i32
  }
  func.func @transform_2(%arg0: i32, %arg1: i32, %arg2: memref<1xi32, #tpu.memory_space<smem>>) -> (i32, i32, i32) {
    %c0_i32 = arith.constant 0 : i32
    %c0_i32_0 = arith.constant 0 : i32
    return %arg0, %arg1, %c0_i32 : i32, i32, i32
  }
}

</mosaic_0001>

<llo_original>
// kernel: tpu_custom_call.1
$region0: #{tpu_custom_call.1}
  #allocation0 [shape = 'u32[]', space=smem, size = 0x4, offset = 0x4, fixed_abs, tag = 'smem constant byte address 0x4 - core index']
  #allocation1 [shape = 'u32[72,128]{1,0:T(1,128)}', space=vmem, size = 0x9000, scoped, tag = 'internal scratch']
  #allocation2 [shape = 's32[1]{0}', space=sflag, size = 0x4, scoped, tag = 'scoped memory for tpu_custom_call.1']
  #allocation3 [shape = 's32[1]{0:T(128)S(6)}', space=smem, size = 0x200, scoped, tag = 'prefetched SMEM operand 0']
  %s0 = inlined_call_operand.<no memory space> [shape: s32[1], index: 0, kind: input, shape index: {}]
  %s1 = inlined_call_operand.hbm [shape: f32[16,2,32], index: 1, kind: input, shape index: {}]
  %s2 = inlined_call_operand.hbm [shape: f32[16,1,32], index: 2, kind: input, shape index: {}]
  %s3 = inlined_call_operand.hbm [shape: f32[16,2,32], index: 3, kind: output, shape index: {}]
  %s4 = sld [smem:[#allocation0]]
  $region49: #{tpu_custom_call.1} parent=0
    _
  %s6 = ssub.s32 1, %s4
  %s7 = scalar_select 0, %s6, %s4
  %8 = sst [smem:[#allocation3]] %s0
  $region1: #{tpu_custom_call.1} parent=0
    #allocation4 [shape = 'u8[4096]{0}', space=vmem, size = 0x1000, scoped, tag = 'input window, operand 1']
    #allocation5 [shape = 's32[2]{0}', space=sflag, size = 0x8, scoped, tag = 'scoped memory for tpu_custom_call.1']
    #allocation6 [shape = 's32[2]{0}', space=sflag, size = 0x8, scoped, tag = 'scoped memory for tpu_custom_call.1']
    #allocation7 [shape = 'u8[2048]{0}', space=vmem, size = 0x800, scoped, tag = 'input window, operand 2']
    #allocation8 [shape = 's32[2]{0}', space=sflag, size = 0x8, scoped, tag = 'scoped memory for tpu_custom_call.1']
    #allocation9 [shape = 'u8[4096]{0}', space=vmem, size = 0x1000, scoped, tag = 'output window, operand 0']
    %9 = vsyncpa [#allocation5], 0
    %s10 = scalar_lea.sflag [#allocation5], 1
    %11 = vsyncpa %s10, 0
    %12 = vsyncpa [#allocation8], 0
    %s13 = scalar_lea.sflag [#allocation8], 1
    %14 = vsyncpa %s13, 0
    %15 = vsyncpa [#allocation6], 0
    %s16 = scalar_lea.sflag [#allocation6], 1
    %17 = vsyncpa %s16, 0
    loop: start=0, step=1, limit=10
    $region2: #{tpu_custom_call.1} parent=1 // loop_pre_header
      _
    $region3: #{tpu_custom_call.1} parent=1 // loop_header
      %s19 = sphi 0, %s23
      %p20 = scmp.ge.s32.totalorder %s19, 10
      %s26 = sphi 0, %s38
      %s27 = sphi 0, %s34
      %s28 = sphi 0, %s26
      %s29 = sphi 0, %s27
      %s30 = sphi 0, %s28
      %s31 = sphi 0, %s29
      %s43 = sphi 0, %s45
      %s46 = sphi 0, %s43
      %s47 = sphi 0, %s46
      %s63 = sphi 0, %s47
      %s69 = sphi 0, %s71
      %s72 = sphi 0, %s69
      %s73 = sphi 0, %s72
      %s89 = sphi 0, %s73
      %s97 = sphi 0, %s99
      %s100 = sphi 0, %s97
      %s101 = sphi 0, %s100
      %s117 = sphi 0, %s101
    $region4: #{tpu_custom_call.1} parent=1 // loop_header_branch
      %22 = sbr.rel (%p20) target = $region8
    $region5: #{tpu_custom_call.1} parent=1 // loop_body
      %s24 = ssub.s32 %s19, 1
      %s25 = ssub.s32 %s19, 2
      %s32 = sadd.s32 1, %s27
      %p33 = scmp.ge.s32.totalorder %s32, 1
      %s34 = scalar_select %p33, 0, %s32
      %s35 = sadd.s32 1, %s26
      %s36 = scalar_select %p33, %s35, %s26
      %p37 = scmp.ge.s32.totalorder %s36, 8
      %s38 = scalar_select %p37, 0, %s36
      %s39 = ssub.s32 %s26, %s38
      %s40 = ssub.s32 %s27, %s34
      %s41 = sor.u32 %s39, %s40
      %p42 = scmp.eq.s32.totalorder %s41, 0
      %s44 = sadd.s32 %s43, 1
      %s45 = scalar_select %p42, %s43, %s44
      %p48 = pneg %p42
      %p49 = scmp.eq.s32.totalorder %s19, 7
      %p50 = por %p48, %p49
      %p51 = scmp.ne.s32.totalorder %s43, %s46
      %p52 = scmp.eq.s32.totalorder %s19, 0
      %p53 = por %p51, %p52
      %p54 = scmp.ne.s32.totalorder %s43, %s46
      %p55 = scmp.eq.s32.totalorder %s24, 7
      %p56 = por %p54, %p55
      %p57 = scmp.ne.s32.totalorder %s46, %s47
      %p58 = scmp.eq.s32.totalorder %s24, 0
      %p59 = por %p57, %p58
      %p60 = scmp.ne.s32.totalorder %s46, %s47
      %p61 = scmp.eq.s32.totalorder %s25, 7
      %p62 = por %p60, %p61
      %p64 = scmp.ne.s32.totalorder %s47, %s63
      %p65 = scmp.eq.s32.totalorder %s25, 0
      %p66 = por %p64, %p65
      %s67 = ssub.s32 %s26, %s38
      %p68 = scmp.eq.s32.totalorder %s67, 0
      %s70 = sadd.s32 %s69, 1
      %s71 = scalar_select %p68, %s69, %s70
      %p74 = pneg %p68
      %p75 = scmp.eq.s32.totalorder %s19, 7
      %p76 = por %p74, %p75
      %p77 = scmp.ne.s32.totalorder %s69, %s72
      %p78 = scmp.eq.s32.totalorder %s19, 0
      %p79 = por %p77, %p78
      %p80 = scmp.ne.s32.totalorder %s69, %s72
      %p81 = scmp.eq.s32.totalorder %s24, 7
      %p82 = por %p80, %p81
      %p83 = scmp.ne.s32.totalorder %s72, %s73
      %p84 = scmp.eq.s32.totalorder %s24, 0
      %p85 = por %p83, %p84
      %p86 = scmp.ne.s32.totalorder %s72, %s73
      %p87 = scmp.eq.s32.totalorder %s25, 7
      %p88 = por %p86, %p87
      %p90 = scmp.ne.s32.totalorder %s73, %s89
      %p91 = scmp.eq.s32.totalorder %s25, 0
      %p92 = por %p90, %p91
      %s93 = ssub.s32 %s26, %s38
      %s94 = ssub.s32 %s27, %s34
      %s95 = sor.u32 %s93, %s94
      %p96 = scmp.eq.s32.totalorder %s95, 0
      %s98 = sadd.s32 %s97, 1
      %s99 = scalar_select %p96, %s97, %s98
      %p102 = pneg %p96
      %p103 = scmp.eq.s32.totalorder %s19, 7
      %p104 = por %p102, %p103
      %p105 = scmp.ne.s32.totalorder %s97, %s100
      %p106 = scmp.eq.s32.totalorder %s19, 0
      %p107 = por %p105, %p106
      %p108 = scmp.ne.s32.totalorder %s97, %s100
      %p109 = scmp.eq.s32.totalorder %s24, 7
      %p110 = por %p108, %p109
      %p111 = scmp.ne.s32.totalorder %s100, %s101
      %p112 = scmp.eq.s32.totalorder %s24, 0
      %p113 = por %p111, %p112
      %p114 = scmp.ne.s32.totalorder %s100, %s101
      %p115 = scmp.eq.s32.totalorder %s25, 7
      %p116 = por %p114, %p115
      %p118 = scmp.ne.s32.totalorder %s101, %s117
      %p119 = scmp.eq.s32.totalorder %s25, 0
      %p120 = por %p118, %p119
      %p121 = scmp.le.s32.totalorder 1, %s19
      %p122 = scmp.lt.s32.totalorder %s19, 9
      %p123 = pnand %p121, %p122
      %p124 = pneg %p123
      // Predicated region
      $region9: #{tpu_custom_call.1} parent=5 // pred_check
        _
      $region10: #{tpu_custom_call.1} parent=5 // pred_check_branch
        %126 = sbr.rel (%p123) target = $region12
      $region11: #{tpu_custom_call.1} parent=5 // pred_region
        %s127 = ssub.s32 %s19, 1
      $region12: #{tpu_custom_call.1} parent=5 // pred_fallthru
        _
      %p128 = scmp.lt.s32.totalorder %s19, 8
      // Predicated region
      $region13: #{tpu_custom_call.1} parent=5 // pred_check
        %p129 = pneg %p128
      $region14: #{tpu_custom_call.1} parent=5 // pred_check_branch
        %131 = sbr.rel (%p129) target = $region16
      $region15: #{tpu_custom_call.1} parent=5 // pred_region
        // Predicated region
        $region17: #{tpu_custom_call.1} parent=15 // pred_check
          %p132 = pneg %p53
        $region18: #{tpu_custom_call.1} parent=15 // pred_check_branch
          %134 = sbr.rel (%p132) target = $region20
        $region19: #{tpu_custom_call.1} parent=15 // pred_region
          %s135 = sand.u32 %s43, 1
          %s136 = scalar_lea.sflag [#allocation5], %s135
          %s137 = sand.u32 %s43, 1
          %s138 = smul.addr %s137, 4
          %s139 = scalar_lea.vmem [#allocation4], %s138
          %s140 = smul.u32 2, %s26
          %142 = vsyncadd %s136, 0
          %s143 = sadd.s32 %s27, %s140
          %s144 = smul.addr %s143, 2
          %s145 = scalar_lea.hbm %s1, %s144
          %s146 = sshll.u32 %s145, 4
          %s147 = int_to_ptr.hbm [resolvable:$true] %s146
          %s148 = sshll.u32 %s139, 4
          %s149 = int_to_ptr.vmem [resolvable:$true] %s148
          %154 = dma.hbm_to_vmem [thread:$0]  %s147, 64, %s149, %s136, 32, 32, 2
        $region20: #{tpu_custom_call.1} parent=15 // pred_fallthru
          _
        // Predicated region
        $region21: #{tpu_custom_call.1} parent=15 // pred_check
          %p155 = pneg %p79
        $region22: #{tpu_custom_call.1} parent=15 // pred_check_branch
          %157 = sbr.rel (%p155) target = $region24
        $region23: #{tpu_custom_call.1} parent=15 // pred_region
          %s158 = sand.u32 %s69, 1
          %s159 = scalar_lea.sflag [#allocation8], %s158
          %s160 = sand.u32 %s69, 1
          %s161 = smul.addr %s160, 2
          %s162 = scalar_lea.vmem [#allocation7], %s161
          %s163 = smul.u32 2, %s26
          %165 = vsyncadd %s159, 0
          %s166 = scalar_lea.hbm %s2, %s163
          %s167 = sshll.u32 %s166, 4
          %s168 = int_to_ptr.hbm [resolvable:$true] %s167
          %s169 = sshll.u32 %s162, 4
          %s170 = int_to_ptr.vmem [resolvable:$true] %s169
          %175 = dma.hbm_to_vmem [thread:$0]  %s168, 32, %s170, %s159, 16, 16, 1
        $region24: #{tpu_custom_call.1} parent=15 // pred_fallthru
          _
      $region16: #{tpu_custom_call.1} parent=5 // pred_fallthru
        _
      %p176 = scmp.le.s32.totalorder 1, %s19
      %p177 = scmp.lt.s32.totalorder %s19, 9
      %p178 = pnand %p176, %p177
      %p179 = pneg %p178
      // Predicated region
      $region25: #{tpu_custom_call.1} parent=5 // pred_check
        _
      $region26: #{tpu_custom_call.1} parent=5 // pred_check_branch
        %181 = sbr.rel (%p178) target = $region28
      $region27: #{tpu_custom_call.1} parent=5 // pred_region
        %s182 = ssub.s32 %s19, 1
        %s183 = sand.u32 %s46, 1
        %s184 = scalar_lea.sflag [#allocation5], %s183
        %s185 = sand.u32 %s46, 1
        %s186 = smul.addr %s185, 4
        %s187 = scalar_lea.vmem [#allocation4], %s186
        // Predicated region
        $region29: #{tpu_custom_call.1} parent=27 // pred_check
          %p188 = pneg %p59
        $region30: #{tpu_custom_call.1} parent=27 // pred_check_branch
          %190 = sbr.rel (%p188) target = $region32
        $region31: #{tpu_custom_call.1} parent=27 // pred_region
          %192 = dma.done %s184, 64
        $region32: #{tpu_custom_call.1} parent=27 // pred_fallthru
          _
        %s193 = sand.u32 %s72, 1
        %s194 = scalar_lea.sflag [#allocation8], %s193
        %s195 = sand.u32 %s72, 1
        %s196 = smul.addr %s195, 2
        %s197 = scalar_lea.vmem [#allocation7], %s196
        // Predicated region
        $region33: #{tpu_custom_call.1} parent=27 // pred_check
          %p198 = pneg %p85
        $region34: #{tpu_custom_call.1} parent=27 // pred_check_branch
          %200 = sbr.rel (%p198) target = $region36
        $region35: #{tpu_custom_call.1} parent=27 // pred_region
          %202 = dma.done %s194, 32
        $region36: #{tpu_custom_call.1} parent=27 // pred_fallthru
          _
        %s203 = sand.u32 %s46, 1
        %s204 = scalar_lea.sflag [#allocation5], %s203
        %s205 = sand.u32 %s46, 1
        %s206 = smul.addr %s205, 4
        %s207 = scalar_lea.vmem [#allocation4], %s206
        %p208 = pneg %p59
        %p209 = pneg %p56
        %s210 = sand.u32 %s72, 1
        %s211 = scalar_lea.sflag [#allocation8], %s210
        %s212 = sand.u32 %s72, 1
        %s213 = smul.addr %s212, 2
        %s214 = scalar_lea.vmem [#allocation7], %s213
        %p215 = pneg %p85
        %p216 = pneg %p82
        %p217 = pneg %p113
        %p218 = pneg %p110
        %s219 = sand.u32 %s100, 1
        %s220 = scalar_lea.sflag [#allocation6], %s219
        %s221 = sand.u32 %s100, 1
        %s222 = smul.addr %s221, 4
        %s223 = scalar_lea.vmem [#allocation9], %s222
        %s224 = smul.u32 2, %s28
        %s225 = smul.u32 2, %s28
        %s226 = smul.u32 2, %s28
        %v227 = vld [vmem:[%s187] sm:$0x3]
        %v228 = vld [vmem:[%s187 + $0x2] sm:$0x3]
        %v229 = vld [vmem:[%s197] sm:$0x1]
        %v230 = vld [vmem:[%s197 + $0x1] sm:$0x1]
        %v233 = vperm.slane %v229, 0
        %v234 = vperm.slane %v230, 0
        %v237 = vadd.f32 %v227, %v233
        %v238 = vadd.f32 %v228, %v234
        %vm239 = vcmask 254976
        %240 = vst.msk [vmem:[%s223] sm:$0x3] %vm239, %v237
        %241 = vst.msk [vmem:[%s223 + $0x2] sm:$0x3] %vm239, %v238
        %s242 = sand.u32 %s100, 1
        %s243 = scalar_lea.sflag [#allocation6], %s242
        %s244 = sand.u32 %s100, 1
        %s245 = smul.addr %s244, 4
        %s246 = scalar_lea.vmem [#allocation9], %s245
        // Predicated region
        $region37: #{tpu_custom_call.1} parent=27 // pred_check
          %p247 = pneg %p110
        $region38: #{tpu_custom_call.1} parent=27 // pred_check_branch
          %249 = sbr.rel (%p247) target = $region40
        $region39: #{tpu_custom_call.1} parent=27 // pred_region
          %s250 = smul.u32 2, %s28
          %252 = vsyncadd %s243, 0
          %s253 = sadd.s32 %s29, %s250
          %s254 = smul.addr %s253, 2
          %s255 = scalar_lea.hbm %s3, %s254
          %s256 = sshll.u32 %s246, 4
          %s257 = int_to_ptr.vmem [resolvable:$true] %s256
          %s258 = sshll.u32 %s255, 4
          %s259 = int_to_ptr.hbm [resolvable:$true] %s258
          %264 = dma.vmem_to_hbm [thread:$0]  %s257, 64, %s259, %s243, 32, 32, 2
        $region40: #{tpu_custom_call.1} parent=27 // pred_fallthru
          _
      $region28: #{tpu_custom_call.1} parent=5 // pred_fallthru
        _
      %p265 = scmp.le.s32.totalorder 2, %s19
      // Predicated region
      $region41: #{tpu_custom_call.1} parent=5 // pred_check
        %p266 = pneg %p265
      $region42: #{tpu_custom_call.1} parent=5 // pred_check_branch
        %268 = sbr.rel (%p266) target = $region44
      $region43: #{tpu_custom_call.1} parent=5 // pred_region
        %s269 = ssub.s32 %s19, 2
        // Predicated region
        $region45: #{tpu_custom_call.1} parent=43 // pred_check
          %p270 = pneg %p116
        $region46: #{tpu_custom_call.1} parent=43 // pred_check_branch
          %272 = sbr.rel (%p270) target = $region48
        $region47: #{tpu_custom_call.1} parent=43 // pred_region
          %s273 = sand.u32 %s101, 1
          %s274 = scalar_lea.sflag [#allocation6], %s273
          %s275 = sand.u32 %s101, 1
          %s276 = smul.addr %s275, 4
          %s277 = scalar_lea.vmem [#allocation9], %s276
          %279 = dma.done %s274, 64
        $region48: #{tpu_custom_call.1} parent=43 // pred_fallthru
          _
      $region44: #{tpu_custom_call.1} parent=5 // pred_fallthru
        _
    $region6: #{tpu_custom_call.1} parent=1 // loop_footer
      %s23 = sadd.s32 1, %s19
    $region7: #{tpu_custom_call.1} parent=1 // loop_footer_branch
      %18 = sbr.rel target = $region3
    $region8: #{tpu_custom_call.1} parent=1 // loop_exit
      _
    %280 = vsyncpa [#allocation5], 1
    %s281 = scalar_lea.sflag [#allocation5], 1
    %282 = vsyncpa %s281, 1
    %283 = vsyncpa [#allocation8], 1
    %s284 = scalar_lea.sflag [#allocation8], 1
    %285 = vsyncpa %s284, 1
    %286 = vsyncpa [#allocation6], 1
    %s287 = scalar_lea.sflag [#allocation6], 1
    %288 = vsyncpa %s287, 1

</llo_original>
